<compile_context>
chip_gen: v5e
topology: v5e:2x2
jax: 0.10.0
libtpu: 0.0.40
codegen_flags: <defaults>
</compile_context>

<pallas_src>
import functools

import jax
import jax.numpy as jnp
from jax.experimental import pallas as pl
from jax.experimental.pallas import tpu as pltpu

HIDDEN = 1024
NUM_CLASSES = 7
LANE = 128  # class dim padded to one full lane tile


def _round_up(x: int, m: int) -> int:
    return ((x + m - 1) // m) * m


def _sublane_align(dtype) -> int:
    """Minimum sublane multiple for a packed dtype (f32->8, bf16->16, int8->32)."""
    return {4: 8, 2: 16, 1: 32}.get(jnp.dtype(dtype).itemsize, 8)


def _head_kernel(x_ref, w_ref, b_ref, o_ref):
    # x_ref: (TB, HIDDEN) bf16/f32; w_ref: (HIDDEN, LANE) bf16/f32
    # b_ref: (1, LANE) f32; o_ref: (TB, LANE)
    acc = jnp.dot(x_ref[...], w_ref[...], preferred_element_type=jnp.float32)
    o_ref[...] = (acc + b_ref[...]).astype(o_ref.dtype)


def prepare_head_params(weight, bias, compute_dtype=jnp.bfloat16):
    """Precompute lane-padded, transposed parameters once (module-init time).

    weight: [NUM_CLASSES, HIDDEN]; bias: [NUM_CLASSES]
    returns w_padded: [HIDDEN, LANE] in compute_dtype (zero-padded columns),
            b_padded: [1, LANE] in f32 (added to the f32 accumulator).
    """
    w_t = weight.astype(compute_dtype).T  # (HIDDEN, NUM_CLASSES)
    w_padded = jnp.zeros((HIDDEN, LANE), compute_dtype).at[:, :NUM_CLASSES].set(w_t)
    b_padded = (jnp.zeros((1, LANE), jnp.float32)
                .at[0, :NUM_CLASSES].set(bias.astype(jnp.float32)))
    return w_padded, b_padded


@functools.partial(
    jax.jit,
    static_argnames=("tb", "vmem_limit_bytes", "min_pallas_batch",
                     "return_padded", "out_dtype"))
def hubert_classification_head(features, w_padded, b_padded, *, tb=1024,
                               vmem_limit_bytes=None, min_pallas_batch=256,
                               return_padded=False, out_dtype=None):
    """features: [B, 1024] (bf16 recommended, f32 supported);
    w_padded: [1024, 128]; b_padded: [1, 128] f32 -> logits [B, 7]
    (or [B, 128] zero-padded logits if return_padded=True)."""
    B, H = features.shape
    assert H == HIDDEN
    assert w_padded.shape == (HIDDEN, LANE)
    assert b_padded.shape == (1, LANE)
    out_dtype = features.dtype if out_dtype is None else out_dtype

    # --- Small-batch fallback: launch/DMA-setup dominated, let XLA handle it.
    if B < min_pallas_batch:
        logits = (jnp.dot(features, w_padded, preferred_element_type=jnp.float32)
                  + b_padded).astype(out_dtype)
        return logits if return_padded else logits[:, :NUM_CLASSES]

    # --- Batch tile selection.
    align = max(_sublane_align(features.dtype), _sublane_align(out_dtype))
    tb_eff = max(align, min(tb, _round_up(B, align)))
    # Ensure >= 2 grid steps when there is enough work, so ("parallel",)
    # can shard batch tiles across v7x's two TensorCores.
    if B >= 2 * align and pl.cdiv(B, tb_eff) < 2:
        tb_eff = max(align, _round_up(pl.cdiv(B, 2), align))
    grid = (pl.cdiv(B, tb_eff),)  # ragged tail handled by OOB masking, no jnp.pad

    compiler_kwargs = dict(dimension_semantics=("parallel",))
    if vmem_limit_bytes is not None:
        compiler_kwargs["vmem_limit_bytes"] = vmem_limit_bytes

    out_padded = pl.pallas_call(
        _head_kernel,
        out_shape=jax.ShapeDtypeStruct((B, LANE), out_dtype),
        grid_spec=pltpu.PrefetchScalarGridSpec(
            num_scalar_prefetch=0,
            grid=grid,
            in_specs=[
                # Features: one (TB, HIDDEN) tile per grid step (pipelined).
                pl.BlockSpec((tb_eff, HIDDEN), lambda i: (i, 0)),
                # Weight / bias: constant index_map -> DMA'd once, resident.
                pl.BlockSpec((HIDDEN, LANE), lambda i: (0, 0)),
                pl.BlockSpec((1, LANE), lambda i: (0, 0)),
            ],
            out_specs=pl.BlockSpec((tb_eff, LANE), lambda i: (i, 0)),
        ),
        compiler_params=pltpu.CompilerParams(**compiler_kwargs),
    )(features, w_padded, b_padded)

    # Drop the lane padding of the class dimension (or hand back padded logits
    # so a downstream kernel can fuse softmax/argmax and skip this pass).
    return out_padded if return_padded else out_padded[:, :NUM_CLASSES]


if __name__ == "__main__":
    key = jax.random.PRNGKey(0)
    k_x, k_w, k_b = jax.random.split(key, 3)

    # Deterministic synthetic parameters matching nn.Linear(1024, 7) shapes.
    bound = 1.0 / (HIDDEN ** 0.5)
    weight = jax.random.uniform(k_w, (NUM_CLASSES, HIDDEN), jnp.float32, -bound, bound)
    bias = jax.random.uniform(k_b, (NUM_CLASSES,), jnp.float32, -bound, bound)

    # Padded/transposed bf16 params, prepared once (not on the hot path).
    w_padded, b_padded = prepare_head_params(weight, bias, compute_dtype=jnp.bfloat16)

    def reference(feats):
        # f32 reference on the (already bf16-rounded) inputs the kernel sees.
        x = feats.astype(jnp.float32)
        w = w_padded[:, :NUM_CLASSES].astype(jnp.float32)
        return x @ w + bias

    tol = dict(atol=2e-2, rtol=2e-2)  # bf16 output rounding

    # 1) Pallas path: batch split across >=2 tiles (megacore) with a ragged tail.
    B1 = 48
    feats1 = jax.random.normal(k_x, (B1, HIDDEN), jnp.float32).astype(jnp.bfloat16)
    out1 = jax.block_until_ready(
        hubert_classification_head(feats1, w_padded, b_padded, min_pallas_batch=0))
    assert out1.shape == (B1, NUM_CLASSES)
    assert jnp.allclose(out1.astype(jnp.float32), reference(feats1), **tol)

    # 2) Pallas path: ragged batch smaller than one aligned tile (OOB-masked block).
    B2 = 20
    feats2 = jax.random.normal(jax.random.PRNGKey(1), (B2, HIDDEN),
                               jnp.float32).astype(jnp.bfloat16)
    out2 = jax.block_until_ready(
        hubert_classification_head(feats2, w_padded, b_padded, min_pallas_batch=0))
    assert out2.shape == (B2, NUM_CLASSES)
    assert jnp.allclose(out2.astype(jnp.float32), reference(feats2), **tol)

    # 3) Tiny-batch fallback path (XLA dot, no pallas_call).
    B3 = 4
    feats3 = jax.random.normal(jax.random.PRNGKey(2), (B3, HIDDEN),
                               jnp.float32).astype(jnp.bfloat16)
    out3 = jax.block_until_ready(
        hubert_classification_head(feats3, w_padded, b_padded))
    assert out3.shape == (B3, NUM_CLASSES)
    assert jnp.allclose(out3.astype(jnp.float32), reference(feats3), **tol)

    print("KERNEL_OK")
</pallas_src>

<mosaic_0001>
module attributes {stable_mosaic.version = 11 : i64} {
  func.func @_head_kernel(%arg0: i32, %arg1: memref<32x1024xbf16, #tpu.memory_space<vmem>>, %arg2: memref<1024x128xbf16, #tpu.memory_space<vmem>>, %arg3: memref<1x128xf32, #tpu.memory_space<vmem>>, %arg4: memref<32x128xbf16, #tpu.memory_space<vmem>>) attributes {dimension_semantics = [#tpu.dimension_semantics<parallel>], iteration_bounds = array<i64: 2>, scalar_prefetch = 0 : i64, scratch_operands = 0 : i64, tpu.core_type = #tpu.core_type<tc>, window_params = [{transform_indices = @transform_0, window_bounds = array<i64: 32, 1024>}, {pipeline_mode = #tpu.pipeline_mode<synchronous>, transform_indices = @transform_1, window_bounds = array<i64: 1024, 128>}, {pipeline_mode = #tpu.pipeline_mode<synchronous>, transform_indices = @transform_2, window_bounds = array<i64: 1, 128>}, {transform_indices = @transform_3, window_bounds = array<i64: 32, 128>}]} {
    %c0 = arith.constant 0 : index
    %c0_0 = arith.constant 0 : index
    %0 = vector.load %arg1[%c0, %c0_0] : memref<32x1024xbf16, #tpu.memory_space<vmem>>, vector<32x1024xbf16>
    %c0_1 = arith.constant 0 : index
    %c0_2 = arith.constant 0 : index
    %1 = vector.load %arg2[%c0_1, %c0_2] : memref<1024x128xbf16, #tpu.memory_space<vmem>>, vector<1024x128xbf16>
    %cst = arith.constant dense<0.000000e+00> : vector<32x128xf32>
    %2 = tpu.matmul %0, %1, %cst {dimension_numbers = #tpu.dot_dimension_numbers<[1], [0], [0], [1], [0, 0, 1, 1], [], []>} : vector<32x1024xbf16>, vector<1024x128xbf16>, vector<32x128xf32> -> vector<32x128xf32>
    %c0_3 = arith.constant 0 : index
    %c0_4 = arith.constant 0 : index
    %3 = vector.load %arg3[%c0_3, %c0_4] : memref<1x128xf32, #tpu.memory_space<vmem>>, vector<1x128xf32>
    %4 = vector.broadcast %3 : vector<1x128xf32> to vector<32x128xf32>
    %5 = arith.addf %2, %4 : vector<32x128xf32>
    %6 = arith.truncf %5 : vector<32x128xf32> to vector<32x128xbf16>
    %c0_5 = arith.constant 0 : index
    %c0_6 = arith.constant 0 : index
    %7 = vector.load %arg4[%c0_5, %c0_6] : memref<32x128xbf16, #tpu.memory_space<vmem>>, vector<32x128xbf16>
    tpu.vector_store %arg4[%c0_5, %c0_6], %6 {strides = array<i32>} : memref<32x128xbf16, #tpu.memory_space<vmem>>, vector<32x128xbf16>,
    return
  }
  func.func @transform_0(%arg0: i32) -> (i32, i32) {
    %c0_i32 = arith.constant 0 : i32
    %c0_i32_0 = arith.constant 0 : i32
    return %arg0, %c0_i32 : i32, i32
  }
  func.func @transform_1(%arg0: i32) -> (i32, i32) {
    %c0_i32 = arith.constant 0 : i32
    %c0_i32_0 = arith.constant 0 : i32
    %c0_i32_1 = arith.constant 0 : i32
    return %c0_i32, %c0_i32_0 : i32, i32
  }
  func.func @transform_2(%arg0: i32) -> (i32, i32) {
    %c0_i32 = arith.constant 0 : i32
    %c0_i32_0 = arith.constant 0 : i32
    %c0_i32_1 = arith.constant 0 : i32
    return %c0_i32, %c0_i32_0 : i32, i32
  }
  func.func @transform_3(%arg0: i32) -> (i32, i32) {
    %c0_i32 = arith.constant 0 : i32
    %c0_i32_0 = arith.constant 0 : i32
    return %arg0, %c0_i32 : i32, i32
  }
}

</mosaic_0001>

<llo_original>
// kernel: hubert_classification_head.1
$region0: #{hubert_classification_head.1}
  #allocation0 [shape = 'u32[]', space=smem, size = 0x4, offset = 0x4, fixed_abs, tag = 'smem constant byte address 0x4 - core index']
  #allocation1 [shape = 'u32[72,128]{1,0:T(1,128)}', space=vmem, size = 0x9000, scoped, tag = 'internal scratch']
  %s0 = inlined_call_operand.hbm [shape: bf16[48,1024], index: 0, kind: input, shape index: {}]
  %s1 = inlined_call_operand.hbm [shape: bf16[1024,128], index: 1, kind: input, shape index: {}]
  %s2 = inlined_call_operand.vmem [shape: f32[1,128], index: 2, kind: input, shape index: {}]
  %s3 = inlined_call_operand.vmem [shape: bf16[48,128], index: 3, kind: output, shape index: {}]
  %s4 = sld [smem:[#allocation0]]
  $region97: #{hubert_classification_head.1} parent=0
    _
  %s6 = ssub.s32 1, %s4
  %s7 = scalar_select 0, %s6, %s4
  $region1: #{hubert_classification_head.1} parent=0
    #allocation2 [shape = 'u8[131072]{0}', space=vmem, size = 0x20000, scoped, tag = 'input window, operand 0']
    #allocation3 [shape = 's32[2]{0}', space=sflag, size = 0x8, scoped, tag = 'scoped memory for hubert_classification_head.1']
    #allocation4 [shape = 'u8[262144]{0}', space=vmem, size = 0x40000, scoped, tag = 'input window, operand 1, single buffered']
    #allocation5 [shape = 's32[1]{0}', space=sflag, size = 0x4, scoped, tag = 'scoped memory for hubert_classification_head.1']
    #allocation6 [shape = 'u8[16384]{0}', space=vmem, size = 0x4000, scoped, tag = 'output window, operand 0']
    %8 = vsyncpa [#allocation3], 0
    %s9 = scalar_lea.sflag [#allocation3], 1
    %10 = vsyncpa %s9, 0
    %11 = vsyncpa [#allocation5], 0
    loop: start=0, step=1, limit=4
    $region2: #{hubert_classification_head.1} parent=1 // loop_pre_header
      _
    $region3: #{hubert_classification_head.1} parent=1 // loop_header
      %s13 = sphi 0, %s17
      %p14 = scmp.ge.s32.totalorder %s13, 4
      %s23 = sphi 0, %s25
      %s26 = sphi 0, %s23
      %s27 = sphi 0, %s26
      %s43 = sphi 0, %s27
      %s47 = sphi 0, %s47
      %s49 = sphi 0, %s47
      %s50 = sphi 0, %s49
      %s64 = sphi 0, %s50
      %s68 = sphi 0, %s68
      %s70 = sphi 0, %s68
      %s71 = sphi 0, %s70
      %s85 = sphi 0, %s71
      %s91 = sphi 0, %s93
      %s94 = sphi 0, %s91
      %s95 = sphi 0, %s94
      %s111 = sphi 0, %s95
    $region4: #{hubert_classification_head.1} parent=1 // loop_header_branch
      %16 = sbr.rel (%p14) target = $region8
    $region5: #{hubert_classification_head.1} parent=1 // loop_body
      %s18 = ssub.s32 %s13, 1
      %s19 = ssub.s32 %s13, 2
      %s20 = sadd.s32 %s13, 1
      %s21 = ssub.s32 %s13, %s20
      %p22 = scmp.eq.s32.totalorder %s21, 0
      %s24 = sadd.s32 %s23, 1
      %s25 = scalar_select %p22, %s23, %s24
      %p28 = pneg %p22
      %p29 = scmp.eq.s32.totalorder %s13, 1
      %p30 = por %p28, %p29
      %p31 = scmp.ne.s32.totalorder %s23, %s26
      %p32 = scmp.eq.s32.totalorder %s13, 0
      %p33 = por %p31, %p32
      %p34 = scmp.ne.s32.totalorder %s23, %s26
      %p35 = scmp.eq.s32.totalorder %s18, 1
      %p36 = por %p34, %p35
      %p37 = scmp.ne.s32.totalorder %s26, %s27
      %p38 = scmp.eq.s32.totalorder %s18, 0
      %p39 = por %p37, %p38
      %p40 = scmp.ne.s32.totalorder %s26, %s27
      %p41 = scmp.eq.s32.totalorder %s19, 1
      %p42 = por %p40, %p41
      %p44 = scmp.ne.s32.totalorder %s27, %s43
      %p45 = scmp.eq.s32.totalorder %s19, 0
      %p46 = por %p44, %p45
      %s48 = sadd.s32 %s47, 1
      %p51 = scmp.eq.s32.totalorder %s13, 1
      %p52 = scmp.ne.s32.totalorder %s47, %s49
      %p53 = scmp.eq.s32.totalorder %s13, 0
      %p54 = por %p52, %p53
      %p55 = scmp.ne.s32.totalorder %s47, %s49
      %p56 = scmp.eq.s32.totalorder %s18, 1
      %p57 = por %p55, %p56
      %p58 = scmp.ne.s32.totalorder %s49, %s50
      %p59 = scmp.eq.s32.totalorder %s18, 0
      %p60 = por %p58, %p59
      %p61 = scmp.ne.s32.totalorder %s49, %s50
      %p62 = scmp.eq.s32.totalorder %s19, 1
      %p63 = por %p61, %p62
      %p65 = scmp.ne.s32.totalorder %s50, %s64
      %p66 = scmp.eq.s32.totalorder %s19, 0
      %p67 = por %p65, %p66
      %s69 = sadd.s32 %s68, 1
      %p72 = scmp.eq.s32.totalorder %s13, 1
      %p73 = scmp.ne.s32.totalorder %s68, %s70
      %p74 = scmp.eq.s32.totalorder %s13, 0
      %p75 = por %p73, %p74
      %p76 = scmp.ne.s32.totalorder %s68, %s70
      %p77 = scmp.eq.s32.totalorder %s18, 1
      %p78 = por %p76, %p77
      %p79 = scmp.ne.s32.totalorder %s70, %s71
      %p80 = scmp.eq.s32.totalorder %s18, 0
      %p81 = por %p79, %p80
      %p82 = scmp.ne.s32.totalorder %s70, %s71
      %p83 = scmp.eq.s32.totalorder %s19, 1
      %p84 = por %p82, %p83
      %p86 = scmp.ne.s32.totalorder %s71, %s85
      %p87 = scmp.eq.s32.totalorder %s19, 0
      %p88 = por %p86, %p87
      %s89 = ssub.s32 %s13, %s20
      %p90 = scmp.eq.s32.totalorder %s89, 0
      %s92 = sadd.s32 %s91, 1
      %s93 = scalar_select %p90, %s91, %s92
      %p96 = pneg %p90
      %p97 = scmp.eq.s32.totalorder %s13, 1
      %p98 = por %p96, %p97
      %p99 = scmp.ne.s32.totalorder %s91, %s94
      %p100 = scmp.eq.s32.totalorder %s13, 0
      %p101 = por %p99, %p100
      %p102 = scmp.ne.s32.totalorder %s91, %s94
      %p103 = scmp.eq.s32.totalorder %s18, 1
      %p104 = por %p102, %p103
      %p105 = scmp.ne.s32.totalorder %s94, %s95
      %p106 = scmp.eq.s32.totalorder %s18, 0
      %p107 = por %p105, %p106
      %p108 = scmp.ne.s32.totalorder %s94, %s95
      %p109 = scmp.eq.s32.totalorder %s19, 1
      %p110 = por %p108, %p109
      %p112 = scmp.ne.s32.totalorder %s95, %s111
      %p113 = scmp.eq.s32.totalorder %s19, 0
      %p114 = por %p112, %p113
      %p115 = scmp.le.s32.totalorder 1, %s13
      %p116 = scmp.lt.s32.totalorder %s13, 3
      %p117 = pnand %p115, %p116
      %p118 = pneg %p117
      // Predicated region
      $region9: #{hubert_classification_head.1} parent=5 // pred_check
        _
      $region10: #{hubert_classification_head.1} parent=5 // pred_check_branch
        %120 = sbr.rel (%p117) target = $region12
      $region11: #{hubert_classification_head.1} parent=5 // pred_region
        %s121 = ssub.s32 %s13, 1
        // Predicated region
        $region13: #{hubert_classification_head.1} parent=11 // pred_check
          %p122 = pneg %p60
        $region14: #{hubert_classification_head.1} parent=11 // pred_check_branch
          %124 = sbr.rel (%p122) target = $region16
        $region15: #{hubert_classification_head.1} parent=11 // pred_region
          %126 = vsyncadd [#allocation5], 0
          %s127 = sshll.u32 %s1, 4
          %s128 = int_to_ptr.hbm [resolvable:$true] %s127
          %s129 = sshll.u32 [#allocation4], 4
          %s130 = int_to_ptr.vmem [resolvable:$true] %s129
          %135 = dma.hbm_to_vmem [thread:$0]  %s128, 8192, %s130, [#allocation5], 64, 64, 4
        $region16: #{hubert_classification_head.1} parent=11 // pred_fallthru
          _
        // Predicated region
        $region17: #{hubert_classification_head.1} parent=11 // pred_check
          %p136 = pneg %p81
        $region18: #{hubert_classification_head.1} parent=11 // pred_check_branch
          %138 = sbr.rel (%p136) target = $region20
        $region19: #{hubert_classification_head.1} parent=11 // pred_region
          _
        $region20: #{hubert_classification_head.1} parent=11 // pred_fallthru
          _
      $region12: #{hubert_classification_head.1} parent=5 // pred_fallthru
        _
      %p139 = scmp.lt.s32.totalorder %s13, 2
      // Predicated region
      $region21: #{hubert_classification_head.1} parent=5 // pred_check
        %p140 = pneg %p139
      $region22: #{hubert_classification_head.1} parent=5 // pred_check_branch
        %142 = sbr.rel (%p140) target = $region24
      $region23: #{hubert_classification_head.1} parent=5 // pred_region
        // Predicated region
        $region25: #{hubert_classification_head.1} parent=23 // pred_check
          %p143 = pneg %p33
        $region26: #{hubert_classification_head.1} parent=23 // pred_check_branch
          %145 = sbr.rel (%p143) target = $region28
        $region27: #{hubert_classification_head.1} parent=23 // pred_region
          %s146 = sand.u32 %s23, 1
          %s147 = scalar_lea.sflag [#allocation3], %s146
          %s148 = sand.u32 %s23, 1
          %s149 = smul.addr %s148, 128
          %s150 = scalar_lea.vmem [#allocation2], %s149
          %s151 = smul.u32 4, %s13
          %s152 = ssub.s32 6, %s151
          %p153 = scmp.lt.s32.totalorder %s152, 4
          %s154 = scalar_select %p153, %s152, 4
          %s155 = smul.u32 4, %s154
          %s156 = smul.u32 %s155, 8
          %s157 = ssub.s32 128, %s156
          %s158 = sshll.u32 %s157, 4
          %159 = vsyncadd %s147, %s158
          %p160 = scmp.ne.s32.totalorder 0, %s156
          %s161 = smul.addr %s151, 8
          %s162 = smul.addr %s161, 4
          %s163 = scalar_lea.hbm %s0, %s162
          %s164 = smul.u32 32, %s154
          %s165 = sshll.u32 %s163, 4
          %s166 = int_to_ptr.hbm [resolvable:$true] %s165
          %s167 = sshll.u32 %s150, 4
          %s168 = int_to_ptr.vmem [resolvable:$true] %s167
          %s169 = sshll.u32 %s164, 4
          %173 = dma.hbm_to_vmem [thread:$0]  (%p160), %s166, %s169, %s168, %s147, 512, 512, 32
        $region28: #{hubert_classification_head.1} parent=23 // pred_fallthru
          _
      $region24: #{hubert_classification_head.1} parent=5 // pred_fallthru
        _
      %p174 = scmp.le.s32.totalorder 1, %s13
      %p175 = scmp.lt.s32.totalorder %s13, 3
      %p176 = pnand %p174, %p175
      %p177 = pneg %p176
      // Predicated region
      $region29: #{hubert_classification_head.1} parent=5 // pred_check
        _
      $region30: #{hubert_classification_head.1} parent=5 // pred_check_branch
        %179 = sbr.rel (%p176) target = $region32
      $region31: #{hubert_classification_head.1} parent=5 // pred_region
        %s180 = ssub.s32 %s13, 1
        %s181 = sand.u32 %s26, 1
        %s182 = scalar_lea.sflag [#allocation3], %s181
        %s183 = sand.u32 %s26, 1
        %s184 = smul.addr %s183, 128
        %s185 = scalar_lea.vmem [#allocation2], %s184
        // Predicated region
        $region33: #{hubert_classification_head.1} parent=31 // pred_check
          %p186 = pneg %p39
        $region34: #{hubert_classification_head.1} parent=31 // pred_check_branch
          %188 = sbr.rel (%p186) target = $region36
        $region35: #{hubert_classification_head.1} parent=31 // pred_region
          %190 = dma.done %s182, 2048
        $region36: #{hubert_classification_head.1} parent=31 // pred_fallthru
          _
        // Predicated region
        $region37: #{hubert_classification_head.1} parent=31 // pred_check
          %p191 = pneg %p60
        $region38: #{hubert_classification_head.1} parent=31 // pred_check_branch
          %193 = sbr.rel (%p191) target = $region40
        $region39: #{hubert_classification_head.1} parent=31 // pred_region
          %195 = dma.done [#allocation5], 8192
        $region40: #{hubert_classification_head.1} parent=31 // pred_fallthru
          _
        %s196 = sand.u32 %s26, 1
        %s197 = scalar_lea.sflag [#allocation3], %s196
        %s198 = sand.u32 %s26, 1
        %s199 = smul.addr %s198, 128
        %s200 = scalar_lea.vmem [#allocation2], %s199
        %p201 = pneg %p39
        %p202 = pneg %p36
        %p203 = pneg %p60
        %p204 = pneg %p57
        %p205 = pneg %p81
        %p206 = pneg %p78
        %p207 = pneg %p107
        %p208 = pneg %p104
        %s209 = sand.u32 %s94, 1
        %s210 = sand.u32 %s94, 1
        %s211 = smul.addr %s210, 16
        %s212 = scalar_lea.vmem [#allocation6], %s211
        %s213 = smul.u32 4, %s18
        %s214 = ssub.s32 6, %s213
        %p215 = scmp.lt.s32.totalorder %s214, 4
        %s216 = scalar_select %p215, %s214, 4
        %s217 = smul.u32 4, %s216
        %s218 = smul.u32 %s217, 8
        %s219 = smul.u32 4, %s18
        %s220 = ssub.s32 6, %s219
        %p221 = scmp.lt.s32.totalorder %s220, 4
        %s222 = scalar_select %p221, %s220, 4
        %s223 = smul.u32 4, %s222
        %v224 = vld [vmem:[%s185] sm:$0xff]
        %v225 = vld [vmem:[%s185 + $0x8] sm:$0xff]
        %v226 = vld [vmem:[%s185 + $0x10] sm:$0xff]
        %v227 = vld [vmem:[%s185 + $0x18] sm:$0xff]
        %v228 = vld [vmem:[%s185 + $0x20] sm:$0xff]
        %v229 = vld [vmem:[%s185 + $0x28] sm:$0xff]
        %v230 = vld [vmem:[%s185 + $0x30] sm:$0xff]
        %v231 = vld [vmem:[%s185 + $0x38] sm:$0xff]
        %v232 = vld [vmem:[%s185 + $0x40] sm:$0xff]
        %v233 = vld [vmem:[%s185 + $0x48] sm:$0xff]
        %v234 = vld [vmem:[%s185 + $0x50] sm:$0xff]
        %v235 = vld [vmem:[%s185 + $0x58] sm:$0xff]
        %v236 = vld [vmem:[%s185 + $0x60] sm:$0xff]
        %v237 = vld [vmem:[%s185 + $0x68] sm:$0xff]
        %v238 = vld [vmem:[%s185 + $0x70] sm:$0xff]
        %v239 = vld [vmem:[%s185 + $0x78] sm:$0xff]
        %v240 = vld [vmem:[#allocation4] sm:$0xf]
        %v241 = vld [vmem:[#allocation4 + $0x4] sm:$0xf]
        %v242 = vld [vmem:[#allocation4 + $0x8] sm:$0xf]
        %v243 = vld [vmem:[#allocation4 + $0xc] sm:$0xf]
        %v244 = vld [vmem:[#allocation4 + $0x10] sm:$0xf]
        %v245 = vld [vmem:[#allocation4 + $0x14] sm:$0xf]
        %v246 = vld [vmem:[#allocation4 + $0x18] sm:$0xf]
        %v247 = vld [vmem:[#allocation4 + $0x1c] sm:$0xf]
        %v248 = vld [vmem:[#allocation4 + $0x20] sm:$0xf]
        %v249 = vld [vmem:[#allocation4 + $0x24] sm:$0xf]
        %v250 = vld [vmem:[#allocation4 + $0x28] sm:$0xf]
        %v251 = vld [vmem:[#allocation4 + $0x2c] sm:$0xf]
        %v252 = vld [vmem:[#allocation4 + $0x30] sm:$0xf]
        %v253 = vld [vmem:[#allocation4 + $0x34] sm:$0xf]
        %v254 = vld [vmem:[#allocation4 + $0x38] sm:$0xf]
        %v255 = vld [vmem:[#allocation4 + $0x3c] sm:$0xf]
        %v256 = vld [vmem:[#allocation4 + $0x40] sm:$0xf]
        %v257 = vld [vmem:[#allocation4 + $0x44] sm:$0xf]
        %v258 = vld [vmem:[#allocation4 + $0x48] sm:$0xf]
        %v259 = vld [vmem:[#allocation4 + $0x4c] sm:$0xf]
        %v260 = vld [vmem:[#allocation4 + $0x50] sm:$0xf]
        %v261 = vld [vmem:[#allocation4 + $0x54] sm:$0xf]
        %v262 = vld [vmem:[#allocation4 + $0x58] sm:$0xf]
        %v263 = vld [vmem:[#allocation4 + $0x5c] sm:$0xf]
        %v264 = vld [vmem:[#allocation4 + $0x60] sm:$0xf]
        %v265 = vld [vmem:[#allocation4 + $0x64] sm:$0xf]
        %v266 = vld [vmem:[#allocation4 + $0x68] sm:$0xf]
        %v267 = vld [vmem:[#allocation4 + $0x6c] sm:$0xf]
        %v268 = vld [vmem:[#allocation4 + $0x70] sm:$0xf]
        %v269 = vld [vmem:[#allocation4 + $0x74] sm:$0xf]
        %v270 = vld [vmem:[#allocation4 + $0x78] sm:$0xf]
        %v271 = vld [vmem:[#allocation4 + $0x7c] sm:$0xf]
        %v272 = vld [vmem:[#allocation4 + $0x80] sm:$0xf]
        %v273 = vld [vmem:[#allocation4 + $0x84] sm:$0xf]
        %v274 = vld [vmem:[#allocation4 + $0x88] sm:$0xf]
        %v275 = vld [vmem:[#allocation4 + $0x8c] sm:$0xf]
        %v276 = vld [vmem:[#allocation4 + $0x90] sm:$0xf]
        %v277 = vld [vmem:[#allocation4 + $0x94] sm:$0xf]
        %v278 = vld [vmem:[#allocation4 + $0x98] sm:$0xf]
        %v279 = vld [vmem:[#allocation4 + $0x9c] sm:$0xf]
        %v280 = vld [vmem:[#allocation4 + $0xa0] sm:$0xf]
        %v281 = vld [vmem:[#allocation4 + $0xa4] sm:$0xf]
        %v282 = vld [vmem:[#allocation4 + $0xa8] sm:$0xf]
        %v283 = vld [vmem:[#allocation4 + $0xac] sm:$0xf]
        %v284 = vld [vmem:[#allocation4 + $0xb0] sm:$0xf]
        %v285 = vld [vmem:[#allocation4 + $0xb4] sm:$0xf]
        %v286 = vld [vmem:[#allocation4 + $0xb8] sm:$0xf]
        %v287 = vld [vmem:[#allocation4 + $0xbc] sm:$0xf]
        %v288 = vld [vmem:[#allocation4 + $0xc0] sm:$0xf]
        %v289 = vld [vmem:[#allocation4 + $0xc4] sm:$0xf]
        %v290 = vld [vmem:[#allocation4 + $0xc8] sm:$0xf]
        %v291 = vld [vmem:[#allocation4 + $0xcc] sm:$0xf]
        %v292 = vld [vmem:[#allocation4 + $0xd0] sm:$0xf]
        %v293 = vld [vmem:[#allocation4 + $0xd4] sm:$0xf]
        %v294 = vld [vmem:[#allocation4 + $0xd8] sm:$0xf]
        %v295 = vld [vmem:[#allocation4 + $0xdc] sm:$0xf]
        %v296 = vld [vmem:[#allocation4 + $0xe0] sm:$0xf]
        %v297 = vld [vmem:[#allocation4 + $0xe4] sm:$0xf]
        %v298 = vld [vmem:[#allocation4 + $0xe8] sm:$0xf]
        %v299 = vld [vmem:[#allocation4 + $0xec] sm:$0xf]
        %v300 = vld [vmem:[#allocation4 + $0xf0] sm:$0xf]
        %v301 = vld [vmem:[#allocation4 + $0xf4] sm:$0xf]
        %v302 = vld [vmem:[#allocation4 + $0xf8] sm:$0xf]
        %v303 = vld [vmem:[#allocation4 + $0xfc] sm:$0xf]
        %v304 = vld [vmem:[#allocation4 + $0x100] sm:$0xf]
        %v305 = vld [vmem:[#allocation4 + $0x104] sm:$0xf]
        %v306 = vld [vmem:[#allocation4 + $0x108] sm:$0xf]
        %v307 = vld [vmem:[#allocation4 + $0x10c] sm:$0xf]
        %v308 = vld [vmem:[#allocation4 + $0x110] sm:$0xf]
        %v309 = vld [vmem:[#allocation4 + $0x114] sm:$0xf]
        %v310 = vld [vmem:[#allocation4 + $0x118] sm:$0xf]
        %v311 = vld [vmem:[#allocation4 + $0x11c] sm:$0xf]
        %v312 = vld [vmem:[#allocation4 + $0x120] sm:$0xf]
        %v313 = vld [vmem:[#allocation4 + $0x124] sm:$0xf]
        %v314 = vld [vmem:[#allocation4 + $0x128] sm:$0xf]
        %v315 = vld [vmem:[#allocation4 + $0x12c] sm:$0xf]
        %v316 = vld [vmem:[#allocation4 + $0x130] sm:$0xf]
        %v317 = vld [vmem:[#allocation4 + $0x134] sm:$0xf]
        %v318 = vld [vmem:[#allocation4 + $0x138] sm:$0xf]
        %v319 = vld [vmem:[#allocation4 + $0x13c] sm:$0xf]
        %v320 = vld [vmem:[#allocation4 + $0x140] sm:$0xf]
        %v321 = vld [vmem:[#allocation4 + $0x144] sm:$0xf]
        %v322 = vld [vmem:[#allocation4 + $0x148] sm:$0xf]
        %v323 = vld [vmem:[#allocation4 + $0x14c] sm:$0xf]
        %v324 = vld [vmem:[#allocation4 + $0x150] sm:$0xf]
        %v325 = vld [vmem:[#allocation4 + $0x154] sm:$0xf]
        %v326 = vld [vmem:[#allocation4 + $0x158] sm:$0xf]
        %v327 = vld [vmem:[#allocation4 + $0x15c] sm:$0xf]
        %v328 = vld [vmem:[#allocation4 + $0x160] sm:$0xf]
        %v329 = vld [vmem:[#allocation4 + $0x164] sm:$0xf]
        %v330 = vld [vmem:[#allocation4 + $0x168] sm:$0xf]
        %v331 = vld [vmem:[#allocation4 + $0x16c] sm:$0xf]
        %v332 = vld [vmem:[#allocation4 + $0x170] sm:$0xf]
        %v333 = vld [vmem:[#allocation4 + $0x174] sm:$0xf]
        %v334 = vld [vmem:[#allocation4 + $0x178] sm:$0xf]
        %v335 = vld [vmem:[#allocation4 + $0x17c] sm:$0xf]
        %v336 = vld [vmem:[#allocation4 + $0x180] sm:$0xf]
        %v337 = vld [vmem:[#allocation4 + $0x184] sm:$0xf]
        %v338 = vld [vmem:[#allocation4 + $0x188] sm:$0xf]
        %v339 = vld [vmem:[#allocation4 + $0x18c] sm:$0xf]
        %v340 = vld [vmem:[#allocation4 + $0x190] sm:$0xf]
        %v341 = vld [vmem:[#allocation4 + $0x194] sm:$0xf]
        %v342 = vld [vmem:[#allocation4 + $0x198] sm:$0xf]
        %v343 = vld [vmem:[#allocation4 + $0x19c] sm:$0xf]
        %v344 = vld [vmem:[#allocation4 + $0x1a0] sm:$0xf]
        %v345 = vld [vmem:[#allocation4 + $0x1a4] sm:$0xf]
        %v346 = vld [vmem:[#allocation4 + $0x1a8] sm:$0xf]
        %v347 = vld [vmem:[#allocation4 + $0x1ac] sm:$0xf]
        %v348 = vld [vmem:[#allocation4 + $0x1b0] sm:$0xf]
        %v349 = vld [vmem:[#allocation4 + $0x1b4] sm:$0xf]
        %v350 = vld [vmem:[#allocation4 + $0x1b8] sm:$0xf]
        %v351 = vld [vmem:[#allocation4 + $0x1bc] sm:$0xf]
        %v352 = vld [vmem:[#allocation4 + $0x1c0] sm:$0xf]
        %v353 = vld [vmem:[#allocation4 + $0x1c4] sm:$0xf]
        %v354 = vld [vmem:[#allocation4 + $0x1c8] sm:$0xf]
        %v355 = vld [vmem:[#allocation4 + $0x1cc] sm:$0xf]
        %v356 = vld [vmem:[#allocation4 + $0x1d0] sm:$0xf]
        %v357 = vld [vmem:[#allocation4 + $0x1d4] sm:$0xf]
        %v358 = vld [vmem:[#allocation4 + $0x1d8] sm:$0xf]
        %v359 = vld [vmem:[#allocation4 + $0x1dc] sm:$0xf]
        %v360 = vld [vmem:[#allocation4 + $0x1e0] sm:$0xf]
        %v361 = vld [vmem:[#allocation4 + $0x1e4] sm:$0xf]
        %v362 = vld [vmem:[#allocation4 + $0x1e8] sm:$0xf]
        %v363 = vld [vmem:[#allocation4 + $0x1ec] sm:$0xf]
        %v364 = vld [vmem:[#allocation4 + $0x1f0] sm:$0xf]
        %v365 = vld [vmem:[#allocation4 + $0x1f4] sm:$0xf]
        %v366 = vld [vmem:[#allocation4 + $0x1f8] sm:$0xf]
        %v367 = vld [vmem:[#allocation4 + $0x1fc] sm:$0xf]
        %v368 = vld [vmem:[%s2] sm:$0x1]
        %v370 = vperm.slane %v368, 0
        %v388 = vunpack.c.l.b16 %v224
        %v389 = vunpack.c.h.b16 %v224
        %v390 = vunpack.c.l.b16 %v225
        %v391 = vunpack.c.h.b16 %v225
        %v392 = vunpack.c.l.b16 %v226
        %v393 = vunpack.c.h.b16 %v226
        %v394 = vunpack.c.l.b16 %v227
        %v395 = vunpack.c.h.b16 %v227
        %v396 = vunpack.c.l.b16 %v228
        %v397 = vunpack.c.h.b16 %v228
        %v398 = vunpack.c.l.b16 %v229
        %v399 = vunpack.c.h.b16 %v229
        %v400 = vunpack.c.l.b16 %v230
        %v401 = vunpack.c.h.b16 %v230
        %v402 = vunpack.c.l.b16 %v231
        %v403 = vunpack.c.h.b16 %v231
        %v404 = vunpack.c.l.b16 %v232
        %v405 = vunpack.c.h.b16 %v232
        %v406 = vunpack.c.l.b16 %v233
        %v407 = vunpack.c.h.b16 %v233
        %v408 = vunpack.c.l.b16 %v234
        %v409 = vunpack.c.h.b16 %v234
        %v410 = vunpack.c.l.b16 %v235
        %v411 = vunpack.c.h.b16 %v235
        %v412 = vunpack.c.l.b16 %v236
        %v413 = vunpack.c.h.b16 %v236
        %v414 = vunpack.c.l.b16 %v237
        %v415 = vunpack.c.h.b16 %v237
        %v416 = vunpack.c.l.b16 %v238
        %v417 = vunpack.c.h.b16 %v238
        %v418 = vunpack.c.l.b16 %v239
        %v419 = vunpack.c.h.b16 %v239
        %v420 = vpack.c.b16 %v396, %v388
        %v421 = vpack.c.b16 %v397, %v389
        %v422 = vpack.c.b16 %v398, %v390
        %v423 = vpack.c.b16 %v399, %v391
        %v424 = vpack.c.b16 %v400, %v392
        %v425 = vpack.c.b16 %v401, %v393
        %v426 = vpack.c.b16 %v402, %v394
        %v427 = vpack.c.b16 %v403, %v395
        %v428 = vpack.c.b16 %v412, %v404
        %v429 = vpack.c.b16 %v413, %v405
        %v430 = vpack.c.b16 %v414, %v406
        %v431 = vpack.c.b16 %v415, %v407
        %v432 = vpack.c.b16 %v416, %v408
        %v433 = vpack.c.b16 %v417, %v409
        %v434 = vpack.c.b16 %v418, %v410
        %v435 = vpack.c.b16 %v419, %v411
        %v580 = vunpack.c.l.b16 %v240
        %v581 = vunpack.c.l.b16 %v241
        %v582 = vunpack.c.l.b16 %v242
        %v583 = vunpack.c.l.b16 %v243
        %v584 = vunpack.c.l.b16 %v244
        %v585 = vunpack.c.l.b16 %v245
        %v586 = vunpack.c.l.b16 %v246
        %v587 = vunpack.c.l.b16 %v247
        %v588 = vunpack.c.l.b16 %v248
        %v589 = vunpack.c.l.b16 %v249
        %v590 = vunpack.c.l.b16 %v250
        %v591 = vunpack.c.l.b16 %v251
        %v592 = vunpack.c.l.b16 %v252
        %v593 = vunpack.c.l.b16 %v253
        %v594 = vunpack.c.l.b16 %v254
        %v595 = vunpack.c.l.b16 %v255
        %v596 = vunpack.c.l.b16 %v256
        %v597 = vunpack.c.l.b16 %v257
        %v598 = vunpack.c.l.b16 %v258
        %v599 = vunpack.c.l.b16 %v259
        %v600 = vunpack.c.l.b16 %v260
        %v601 = vunpack.c.l.b16 %v261
        %v602 = vunpack.c.l.b16 %v262
        %v603 = vunpack.c.l.b16 %v263
        %v604 = vunpack.c.l.b16 %v264
        %v605 = vunpack.c.l.b16 %v265
        %v606 = vunpack.c.l.b16 %v266
        %v607 = vunpack.c.l.b16 %v267
        %v608 = vunpack.c.l.b16 %v268
        %v609 = vunpack.c.l.b16 %v269
        %v610 = vunpack.c.l.b16 %v270
        %v611 = vunpack.c.l.b16 %v271
        %v612 = vunpack.c.l.b16 %v272
        %v613 = vunpack.c.l.b16 %v273
        %v614 = vunpack.c.l.b16 %v274
        %v615 = vunpack.c.l.b16 %v275
        %v616 = vunpack.c.l.b16 %v276
        %v617 = vunpack.c.l.b16 %v277
        %v618 = vunpack.c.l.b16 %v278
        %v619 = vunpack.c.l.b16 %v279
        %v620 = vunpack.c.l.b16 %v280
        %v621 = vunpack.c.l.b16 %v281
        %v622 = vunpack.c.l.b16 %v282
        %v623 = vunpack.c.l.b16 %v283
        %v624 = vunpack.c.l.b16 %v284
        %v625 = vunpack.c.l.b16 %v285
        %v626 = vunpack.c.l.b16 %v286
        %v627 = vunpack.c.l.b16 %v287
        %v628 = vunpack.c.l.b16 %v288
        %v629 = vunpack.c.l.b16 %v289
        %v630 = vunpack.c.l.b16 %v290
        %v631 = vunpack.c.l.b16 %v291
        %v632 = vunpack.c.l.b16 %v292
        %v633 = vunpack.c.l.b16 %v293
        %v634 = vunpack.c.l.b16 %v294
        %v635 = vunpack.c.l.b16 %v295
        %v636 = vunpack.c.l.b16 %v296
        %v637 = vunpack.c.l.b16 %v297
        %v638 = vunpack.c.l.b16 %v298
        %v639 = vunpack.c.l.b16 %v299
        %v640 = vunpack.c.l.b16 %v300
        %v641 = vunpack.c.l.b16 %v301
        %v642 = vunpack.c.l.b16 %v302
        %v643 = vunpack.c.l.b16 %v303
        %v644 = vunpack.c.l.b16 %v304
        %v645 = vunpack.c.l.b16 %v305
        %v646 = vunpack.c.l.b16 %v306
        %v647 = vunpack.c.l.b16 %v307
        %v648 = vunpack.c.l.b16 %v308
        %v649 = vunpack.c.l.b16 %v309
        %v650 = vunpack.c.l.b16 %v310
        %v651 = vunpack.c.l.b16 %v311
        %v652 = vunpack.c.l.b16 %v312
        %v653 = vunpack.c.l.b16 %v313
        %v654 = vunpack.c.l.b16 %v314
        %v655 = vunpack.c.l.b16 %v315
        %v656 = vunpack.c.l.b16 %v316
        %v657 = vunpack.c.l.b16 %v317
        %v658 = vunpack.c.l.b16 %v318
        %v659 = vunpack.c.l.b16 %v319
        %v660 = vunpack.c.l.b16 %v320
        %v661 = vunpack.c.l.b16 %v321
        %v662 = vunpack.c.l.b16 %v322
        %v663 = vunpack.c.l.b16 %v323
        %v664 = vunpack.c.l.b16 %v324
        %v665 = vunpack.c.l.b16 %v325
        %v666 = vunpack.c.l.b16 %v326
        %v667 = vunpack.c.l.b16 %v327
        %v668 = vunpack.c.l.b16 %v328
        %v669 = vunpack.c.l.b16 %v329
        %v670 = vunpack.c.l.b16 %v330
        %v671 = vunpack.c.l.b16 %v331
        %v672 = vunpack.c.l.b16 %v332
        %v673 = vunpack.c.l.b16 %v333
        %v674 = vunpack.c.l.b16 %v334
        %v675 = vunpack.c.l.b16 %v335
        %v676 = vunpack.c.l.b16 %v336
        %v677 = vunpack.c.l.b16 %v337
        %v678 = vunpack.c.l.b16 %v338
        %v679 = vunpack.c.l.b16 %v339
        %v680 = vunpack.c.l.b16 %v340
        %v681 = vunpack.c.l.b16 %v341
        %v682 = vunpack.c.l.b16 %v342
        %v683 = vunpack.c.l.b16 %v343
        %v684 = vunpack.c.l.b16 %v344
        %v685 = vunpack.c.l.b16 %v345
        %v686 = vunpack.c.l.b16 %v346
        %v687 = vunpack.c.l.b16 %v347
        %v688 = vunpack.c.l.b16 %v348
        %v689 = vunpack.c.l.b16 %v349
        %v690 = vunpack.c.l.b16 %v350
        %v691 = vunpack.c.l.b16 %v351
        %v692 = vunpack.c.l.b16 %v352
        %v693 = vunpack.c.l.b16 %v353
        %v694 = vunpack.c.l.b16 %v354
        %v695 = vunpack.c.l.b16 %v355
        %v696 = vunpack.c.l.b16 %v356
        %v697 = vunpack.c.l.b16 %v357
        %v698 = vunpack.c.l.b16 %v358
        %v699 = vunpack.c.l.b16 %v359
        %v700 = vunpack.c.l.b16 %v360
        %v701 = vunpack.c.l.b16 %v361
        %v702 = vunpack.c.l.b16 %v362
        %v703 = vunpack.c.l.b16 %v363
        %v704 = vunpack.c.l.b16 %v364
        %v705 = vunpack.c.l.b16 %v365
        %v706 = vunpack.c.l.b16 %v366
        %v707 = vunpack.c.l.b16 %v367
        %v708 = vpack.c.b16 %v581, %v580
        %v709 = vpack.c.b16 %v583, %v582
        %v710 = vpack.c.b16 %v585, %v584
        %v711 = vpack.c.b16 %v587, %v586
        %v712 = vpack.c.b16 %v589, %v588
        %v713 = vpack.c.b16 %v591, %v590
        %v714 = vpack.c.b16 %v593, %v592
        %v715 = vpack.c.b16 %v595, %v594
        %v716 = vpack.c.b16 %v597, %v596
        %v717 = vpack.c.b16 %v599, %v598
        %v718 = vpack.c.b16 %v601, %v600
        %v719 = vpack.c.b16 %v603, %v602
        %v720 = vpack.c.b16 %v605, %v604
        %v721 = vpack.c.b16 %v607, %v606
        %v722 = vpack.c.b16 %v609, %v608
        %v723 = vpack.c.b16 %v611, %v610
        %v724 = vpack.c.b16 %v613, %v612
        %v725 = vpack.c.b16 %v615, %v614
        %v726 = vpack.c.b16 %v617, %v616
        %v727 = vpack.c.b16 %v619, %v618
        %v728 = vpack.c.b16 %v621, %v620
        %v729 = vpack.c.b16 %v623, %v622
        %v730 = vpack.c.b16 %v625, %v624
        %v731 = vpack.c.b16 %v627, %v626
        %v732 = vpack.c.b16 %v629, %v628
        %v733 = vpack.c.b16 %v631, %v630
        %v734 = vpack.c.b16 %v633, %v632
        %v735 = vpack.c.b16 %v635, %v634
        %v736 = vpack.c.b16 %v637, %v636
        %v737 = vpack.c.b16 %v639, %v638
        %v738 = vpack.c.b16 %v641, %v640
        %v739 = vpack.c.b16 %v643, %v642
        %v740 = vpack.c.b16 %v645, %v644
        %v741 = vpack.c.b16 %v647, %v646
        %v742 = vpack.c.b16 %v649, %v648
        %v743 = vpack.c.b16 %v651, %v650
        %v744 = vpack.c.b16 %v653, %v652
        %v745 = vpack.c.b16 %v655, %v654
        %v746 = vpack.c.b16 %v657, %v656
        %v747 = vpack.c.b16 %v659, %v658
        %v748 = vpack.c.b16 %v661, %v660
        %v749 = vpack.c.b16 %v663, %v662
        %v750 = vpack.c.b16 %v665, %v664
        %v751 = vpack.c.b16 %v667, %v666
        %v752 = vpack.c.b16 %v669, %v668
        %v753 = vpack.c.b16 %v671, %v670
        %v754 = vpack.c.b16 %v673, %v672
        %v755 = vpack.c.b16 %v675, %v674
        %v756 = vpack.c.b16 %v677, %v676
        %v757 = vpack.c.b16 %v679, %v678
        %v758 = vpack.c.b16 %v681, %v680
        %v759 = vpack.c.b16 %v683, %v682
        %v760 = vpack.c.b16 %v685, %v684
        %v761 = vpack.c.b16 %v687, %v686
        %v762 = vpack.c.b16 %v689, %v688
        %v763 = vpack.c.b16 %v691, %v690
        %v764 = vpack.c.b16 %v693, %v692
        %v765 = vpack.c.b16 %v695, %v694
        %v766 = vpack.c.b16 %v697, %v696
        %v767 = vpack.c.b16 %v699, %v698
        %v768 = vpack.c.b16 %v701, %v700
        %v769 = vpack.c.b16 %v703, %v702
        %v770 = vpack.c.b16 %v705, %v704
        %v771 = vpack.c.b16 %v707, %v706
        %836 = vmatpush.bf16.msra.mxu0 %v715
        %837 = vmatpush.bf16.msra.mxu0 %v714
        %838 = vmatpush.bf16.msra.mxu0 %v713
        %839 = vmatpush.bf16.msra.mxu0 %v712
        %840 = vmatpush.bf16.msra.mxu0 %v711
        %841 = vmatpush.bf16.msra.mxu0 %v710
        %842 = vmatpush.bf16.msra.mxu0 %v709
        %843 = vmatpush.bf16.msra.mxu0 %v708
        %844 = vmatmul.bf16.gmra.mxu0 %v420
        %v845 = vpop.f32.mrf.mxu0
        %v846 = vadd.f32 %v370, %v845
        %v847 = vpop.f32.mrf.mxu0
        %v848 = vadd.f32 %v370, %v847
        %849 = vmatmul.bf16.gmra.mxu0 %v428
        %v850 = vpop.f32.mrf.mxu0
        %v851 = vadd.f32 %v370, %v850
        %v852 = vpop.f32.mrf.mxu0
        %v853 = vadd.f32 %v370, %v852
        %854 = vdwg.mxu0
        %855 = vmatpush.bf16.msra.mxu0 %v723
        %856 = vmatpush.bf16.msra.mxu0 %v722
        %857 = vmatpush.bf16.msra.mxu0 %v721
        %858 = vmatpush.bf16.msra.mxu0 %v720
        %859 = vmatpush.bf16.msra.mxu0 %v719
        %860 = vmatpush.bf16.msra.mxu0 %v718
        %861 = vmatpush.bf16.msra.mxu0 %v717
        %862 = vmatpush.bf16.msra.mxu0 %v716
        %863 = vmatmul.bf16.gmra.mxu0 %v421
        %v864 = vpop.f32.mrf.mxu0
        %v865 = vadd.f32 %v846, %v864
        %v866 = vpop.f32.mrf.mxu0
        %v867 = vadd.f32 %v848, %v866
        %868 = vmatmul.bf16.gmra.mxu0 %v429
        %v869 = vpop.f32.mrf.mxu0
        %v870 = vadd.f32 %v851, %v869
        %v871 = vpop.f32.mrf.mxu0
        %v872 = vadd.f32 %v853, %v871
        %873 = vdwg.mxu0
        %874 = vmatpush.bf16.msra.mxu0 %v731
        %875 = vmatpush.bf16.msra.mxu0 %v730
        %876 = vmatpush.bf16.msra.mxu0 %v729
        %877 = vmatpush.bf16.msra.mxu0 %v728
        %878 = vmatpush.bf16.msra.mxu0 %v727
        %879 = vmatpush.bf16.msra.mxu0 %v726
        %880 = vmatpush.bf16.msra.mxu0 %v725
        %881 = vmatpush.bf16.msra.mxu0 %v724
        %882 = vmatmul.bf16.gmra.mxu0 %v422
        %v883 = vpop.f32.mrf.mxu0
        %v884 = vadd.f32 %v865, %v883
        %v885 = vpop.f32.mrf.mxu0
        %v886 = vadd.f32 %v867, %v885
        %887 = vmatmul.bf16.gmra.mxu0 %v430
        %v888 = vpop.f32.mrf.mxu0
        %v889 = vadd.f32 %v870, %v888
        %v890 = vpop.f32.mrf.mxu0
        %v891 = vadd.f32 %v872, %v890
        %892 = vdwg.mxu0
        %893 = vmatpush.bf16.msra.mxu0 %v739
        %894 = vmatpush.bf16.msra.mxu0 %v738
        %895 = vmatpush.bf16.msra.mxu0 %v737
        %896 = vmatpush.bf16.msra.mxu0 %v736
        %897 = vmatpush.bf16.msra.mxu0 %v735
        %898 = vmatpush.bf16.msra.mxu0 %v734
        %899 = vmatpush.bf16.msra.mxu0 %v733
        %900 = vmatpush.bf16.msra.mxu0 %v732
        %901 = vmatmul.bf16.gmra.mxu0 %v423
        %v902 = vpop.f32.mrf.mxu0
        %v903 = vadd.f32 %v884, %v902
        %v904 = vpop.f32.mrf.mxu0
        %v905 = vadd.f32 %v886, %v904
        %906 = vmatmul.bf16.gmra.mxu0 %v431
        %v907 = vpop.f32.mrf.mxu0
        %v908 = vadd.f32 %v889, %v907
        %v909 = vpop.f32.mrf.mxu0
        %v910 = vadd.f32 %v891, %v909
        %911 = vdwg.mxu0
        %912 = vmatpush.bf16.msra.mxu0 %v747
        %913 = vmatpush.bf16.msra.mxu0 %v746
        %914 = vmatpush.bf16.msra.mxu0 %v745
        %915 = vmatpush.bf16.msra.mxu0 %v744
        %916 = vmatpush.bf16.msra.mxu0 %v743
        %917 = vmatpush.bf16.msra.mxu0 %v742
        %918 = vmatpush.bf16.msra.mxu0 %v741
        %919 = vmatpush.bf16.msra.mxu0 %v740
        %920 = vmatmul.bf16.gmra.mxu0 %v424
        %v921 = vpop.f32.mrf.mxu0
        %v922 = vadd.f32 %v903, %v921
        %v923 = vpop.f32.mrf.mxu0
        %v924 = vadd.f32 %v905, %v923
        %925 = vmatmul.bf16.gmra.mxu0 %v432
        %v926 = vpop.f32.mrf.mxu0
        %v927 = vadd.f32 %v908, %v926
        %v928 = vpop.f32.mrf.mxu0
        %v929 = vadd.f32 %v910, %v928
        %930 = vdwg.mxu0
        %931 = vmatpush.bf16.msra.mxu0 %v755
        %932 = vmatpush.bf16.msra.mxu0 %v754
        %933 = vmatpush.bf16.msra.mxu0 %v753
        %934 = vmatpush.bf16.msra.mxu0 %v752
        %935 = vmatpush.bf16.msra.mxu0 %v751
        %936 = vmatpush.bf16.msra.mxu0 %v750
        %937 = vmatpush.bf16.msra.mxu0 %v749
        %938 = vmatpush.bf16.msra.mxu0 %v748
        %939 = vmatmul.bf16.gmra.mxu0 %v425
        %v940 = vpop.f32.mrf.mxu0
        %v941 = vadd.f32 %v922, %v940
        %v942 = vpop.f32.mrf.mxu0
        %v943 = vadd.f32 %v924, %v942
        %944 = vmatmul.bf16.gmra.mxu0 %v433
        %v945 = vpop.f32.mrf.mxu0
        %v946 = vadd.f32 %v927, %v945
        %v947 = vpop.f32.mrf.mxu0
        %v948 = vadd.f32 %v929, %v947
        %949 = vdwg.mxu0
        %950 = vmatpush.bf16.msra.mxu0 %v763
        %951 = vmatpush.bf16.msra.mxu0 %v762
        %952 = vmatpush.bf16.msra.mxu0 %v761
        %953 = vmatpush.bf16.msra.mxu0 %v760
        %954 = vmatpush.bf16.msra.mxu0 %v759
        %955 = vmatpush.bf16.msra.mxu0 %v758
        %956 = vmatpush.bf16.msra.mxu0 %v757
        %957 = vmatpush.bf16.msra.mxu0 %v756
        %958 = vmatmul.bf16.gmra.mxu0 %v426
        %v959 = vpop.f32.mrf.mxu0
        %v960 = vadd.f32 %v941, %v959
        %v961 = vpop.f32.mrf.mxu0
        %v962 = vadd.f32 %v943, %v961
        %963 = vmatmul.bf16.gmra.mxu0 %v434
        %v964 = vpop.f32.mrf.mxu0
        %v965 = vadd.f32 %v946, %v964
        %v966 = vpop.f32.mrf.mxu0
        %v967 = vadd.f32 %v948, %v966
        %968 = vdwg.mxu0
        %969 = vmatpush.bf16.msra.mxu0 %v771
        %970 = vmatpush.bf16.msra.mxu0 %v770
        %971 = vmatpush.bf16.msra.mxu0 %v769
        %972 = vmatpush.bf16.msra.mxu0 %v768
        %973 = vmatpush.bf16.msra.mxu0 %v767
        %974 = vmatpush.bf16.msra.mxu0 %v766
        %975 = vmatpush.bf16.msra.mxu0 %v765
        %976 = vmatpush.bf16.msra.mxu0 %v764
        %977 = vmatmul.bf16.gmra.mxu0 %v427
        %v978 = vpop.f32.mrf.mxu0
        %v979 = vadd.f32 %v960, %v978
        %v980 = vpop.f32.mrf.mxu0
        %v981 = vadd.f32 %v962, %v980
        %982 = vmatmul.bf16.gmra.mxu0 %v435
        %v983 = vpop.f32.mrf.mxu0
        %v984 = vadd.f32 %v965, %v983
        %v985 = vpop.f32.mrf.mxu0
        %v986 = vadd.f32 %v967, %v985
        %987 = vdwg.mxu0
        %v988 = vpack.c.bf16 %v979, %v979
        %v989 = vpack.c.bf16 %v981, %v981
        %v990 = vpack.c.bf16 %v984, %v984
        %v991 = vpack.c.bf16 %v986, %v986
        %992 = vst [vmem:[%s212] sm:$0xf] %v988
        %993 = vst [vmem:[%s212 + $0x4] sm:$0xf] %v989
        %994 = vst [vmem:[%s212 + $0x8] sm:$0xf] %v990
        %995 = vst [vmem:[%s212 + $0xc] sm:$0xf] %v991
        %s996 = sand.u32 %s94, 1
        %s997 = sand.u32 %s94, 1
        %s998 = smul.addr %s997, 16
        %s999 = scalar_lea.vmem [#allocation6], %s998
        // Predicated region
        $region41: #{hubert_classification_head.1} parent=31 // pred_check
          %p1000 = pneg %p104
        $region42: #{hubert_classification_head.1} parent=31 // pred_check_branch
          %1002 = sbr.rel (%p1000) target = $region44
        $region43: #{hubert_classification_head.1} parent=31 // pred_region
          %s1003 = smul.u32 4, %s18
          %s1004 = ssub.s32 6, %s1003
          %p1005 = scmp.lt.s32.totalorder %s1004, 4
          %s1006 = scalar_select %p1005, %s1004, 4
          %s1007 = smul.u32 4, %s1006
          %p1008 = scmp.ne.s32.totalorder 0, %s1007
          %s1009 = smul.addr %s1003, 4
          %s1010 = scalar_lea.vmem %s3, %s1009
          // Predicated region
          $region45: #{hubert_classification_head.1} parent=43 // pred_check
            %p1011 = pneg %p1008
          $region46: #{hubert_classification_head.1} parent=43 // pred_check_branch
            %1013 = sbr.rel (%p1011) target = $region48
          $region47: #{hubert_classification_head.1} parent=43 // pred_region
            // Predicated region
            $region49: #{hubert_classification_head.1} parent=47 // pred_check
              _
            $region50: #{hubert_classification_head.1} parent=47 // pred_check_branch
              %1015 = sbr.rel target = $region52
            $region51: #{hubert_classification_head.1} parent=47 // pred_region
              // Predicated region
              $region71: #{hubert_classification_head.1} parent=51 // pred_check
                _
              $region72: #{hubert_classification_head.1} parent=51 // pred_check_branch
                %1071 = sbr.rel (0) target = $region74
              $region73: #{hubert_classification_head.1} parent=51 // pred_region
                %s1073 = ssub.s32 16, 1
                %s1074 = sshrl.u32 %s1006, 2
                // While loop
                $region75: #{hubert_classification_head.1} parent=73 // loop_pre_header
                  _
                $region76: #{hubert_classification_head.1} parent=73 // loop_header
                  %s1076 = sphi 0, %s1078
                  %p1077 = scmp.ge.s32.totalorder %s1076, %s1074
                  %s1081 = sphi 0, %s1094
                  %s1082 = sphi %s999, %s1097
                  %s1083 = sphi %s1010, %s1098
                $region77: #{hubert_classification_head.1} parent=73 // loop_header_branch
                  %1080 = sbr.rel (%p1077) target = $region81
                $region78: #{hubert_classification_head.1} parent=73 // loop_body
                  %v1084 = vld [vmem:[%s1082] sm:%s1073]
                  %1085 = vst [vmem:[%s1083] sm:%s1073] %v1084
                  %v1086 = vld [vmem:[%s1082 + $0x4] sm:%s1073]
                  %1087 = vst [vmem:[%s1083 + $0x4] sm:%s1073] %v1086
                  %v1088 = vld [vmem:[%s1082 + $0x8] sm:%s1073]
                  %1089 = vst [vmem:[%s1083 + $0x8] sm:%s1073] %v1088
                  %v1090 = vld [vmem:[%s1082 + $0xc] sm:%s1073]
                  %1091 = vst [vmem:[%s1083 + $0xc] sm:%s1073] %v1090
                  %s1092 = sadd.s32 1, %s1081
                  %p1093 = scmp.ge.s32.totalorder %s1092, %s1074
                  %s1094 = scalar_select %p1093, 0, %s1092
                  %s1095 = smul.u32 %s1094, 16
                  %s1096 = smul.u32 %s1094, 16
                  %s1097 = scalar_lea.vmem %s999, %s1095 [#allocation6]
                  %s1098 = scalar_lea.vmem %s1010, %s1096
                $region79: #{hubert_classification_head.1} parent=73 // loop_footer
                  %s1078 = sadd.s32 %s1076, 1
                $region80: #{hubert_classification_head.1} parent=73 // loop_footer_branch
                  %1075 = sbr.rel target = $region76
                $region81: #{hubert_classification_head.1} parent=73 // loop_exit
                  _
                %s1099 = sshrl.u32 %s1006, 2
                %s1100 = sand.u32 %s1006, 3
                %s1101 = smul.u32 %s1099, 4
                %s1102 = smul.u32 4, %s1101
                %s1103 = scalar_lea.vmem %s999, %s1102 [#allocation6]
                %s1104 = smul.u32 4, %s1101
                %s1105 = scalar_lea.vmem %s1010, %s1104
                // While loop
                $region82: #{hubert_classification_head.1} parent=73 // loop_pre_header
                  _
                $region83: #{hubert_classification_head.1} parent=73 // loop_header
                  %s1107 = sphi 0, %s1109
                  %p1108 = scmp.ge.s32.totalorder %s1107, %s1100
                  %s1112 = sphi 0, %s1119
                  %s1113 = sphi %s1103, %s1122
                  %s1114 = sphi %s1105, %s1123
                $region84: #{hubert_classification_head.1} parent=73 // loop_header_branch
                  %1111 = sbr.rel (%p1108) target = $region88
                $region85: #{hubert_classification_head.1} parent=73 // loop_body
                  %v1115 = vld [vmem:[%s1113] sm:%s1073]
                  %1116 = vst [vmem:[%s1114] sm:%s1073] %v1115
                  %s1117 = sadd.s32 1, %s1112
                  %p1118 = scmp.ge.s32.totalorder %s1117, %s1100
                  %s1119 = scalar_select %p1118, 0, %s1117
                  %s1120 = smul.u32 %s1119, 4
                  %s1121 = smul.u32 %s1119, 4
                  %s1122 = scalar_lea.vmem %s1103, %s1120 [#allocation6]
                  %s1123 = scalar_lea.vmem %s1105, %s1121
                $region86: #{hubert_classification_head.1} parent=73 // loop_footer
                  %s1109 = sadd.s32 %s1107, 1
                $region87: #{hubert_classification_head.1} parent=73 // loop_footer_branch
                  %1106 = sbr.rel target = $region83
                $region88: #{hubert_classification_head.1} parent=73 // loop_exit
                  _
              $region74: #{hubert_classification_head.1} parent=51 // pred_fallthru
                _
            $region52: #{hubert_classification_head.1} parent=47 // pred_fallthru
              _
            // Predicated region
            $region53: #{hubert_classification_head.1} parent=47 // pred_check
              _
            $region54: #{hubert_classification_head.1} parent=47 // pred_check_branch
              %1017 = sbr.rel (0) target = $region56
            $region55: #{hubert_classification_head.1} parent=47 // pred_region
              %s1019 = ssub.s32 16, 1
              %s1020 = sshrl.u32 %s1006, 2
              // While loop
              $region57: #{hubert_classification_head.1} parent=55 // loop_pre_header
                _
              $region58: #{hubert_classification_head.1} parent=55 // loop_header
                %s1022 = sphi 0, %s1024
                %p1023 = scmp.ge.s32.totalorder %s1022, %s1020
                %s1027 = sphi 0, %s1040
                %s1028 = sphi %s999, %s1043
                %s1029 = sphi %s1010, %s1044
              $region59: #{hubert_classification_head.1} parent=55 // loop_header_branch
                %1026 = sbr.rel (%p1023) target = $region63
              $region60: #{hubert_classification_head.1} parent=55 // loop_body
                %v1030 = vld [vmem:[%s1028] sm:%s1019]
                %1031 = vst [vmem:[%s1029] sm:%s1019] %v1030
                %v1032 = vld [vmem:[%s1028 + $0x4] sm:%s1019]
                %1033 = vst [vmem:[%s1029 + $0x4] sm:%s1019] %v1032
                %v1034 = vld [vmem:[%s1028 + $0x8] sm:%s1019]
                %1035 = vst [vmem:[%s1029 + $0x8] sm:%s1019] %v1034
                %v1036 = vld [vmem:[%s1028 + $0xc] sm:%s1019]
                %1037 = vst [vmem:[%s1029 + $0xc] sm:%s1019] %v1036
                %s1038 = sadd.s32 1, %s1027
                %p1039 = scmp.ge.s32.totalorder %s1038, %s1020
                %s1040 = scalar_select %p1039, 0, %s1038
                %s1041 = smul.u32 %s1040, 16
                %s1042 = smul.u32 %s1040, 16
                %s1043 = scalar_lea.vmem %s999, %s1041 [#allocation6]
                %s1044 = scalar_lea.vmem %s1010, %s1042
              $region61: #{hubert_classification_head.1} parent=55 // loop_footer
                %s1024 = sadd.s32 %s1022, 1
              $region62: #{hubert_classification_head.1} parent=55 // loop_footer_branch
                %1021 = sbr.rel target = $region58
              $region63: #{hubert_classification_head.1} parent=55 // loop_exit
                _
              %s1045 = sshrl.u32 %s1006, 2
              %s1046 = sand.u32 %s1006, 3
              %s1047 = smul.u32 %s1045, 4
              %s1048 = smul.u32 4, %s1047
              %s1049 = scalar_lea.vmem %s999, %s1048 [#allocation6]
              %s1050 = smul.u32 4, %s1047
              %s1051 = scalar_lea.vmem %s1010, %s1050
              // While loop
              $region64: #{hubert_classification_head.1} parent=55 // loop_pre_header
                _
              $region65: #{hubert_classification_head.1} parent=55 // loop_header
                %s1053 = sphi 0, %s1055
                %p1054 = scmp.ge.s32.totalorder %s1053, %s1046
                %s1058 = sphi 0, %s1065
                %s1059 = sphi %s1049, %s1068
                %s1060 = sphi %s1051, %s1069
              $region66: #{hubert_classification_head.1} parent=55 // loop_header_branch
                %1057 = sbr.rel (%p1054) target = $region70
              $region67: #{hubert_classification_head.1} parent=55 // loop_body
                %v1061 = vld [vmem:[%s1059] sm:%s1019]
                %1062 = vst [vmem:[%s1060] sm:%s1019] %v1061
                %s1063 = sadd.s32 1, %s1058
                %p1064 = scmp.ge.s32.totalorder %s1063, %s1046
                %s1065 = scalar_select %p1064, 0, %s1063
                %s1066 = smul.u32 %s1065, 4
                %s1067 = smul.u32 %s1065, 4
                %s1068 = scalar_lea.vmem %s1049, %s1066 [#allocation6]
                %s1069 = scalar_lea.vmem %s1051, %s1067
              $region68: #{hubert_classification_head.1} parent=55 // loop_footer
                %s1055 = sadd.s32 %s1053, 1
              $region69: #{hubert_classification_head.1} parent=55 // loop_footer_branch
                %1052 = sbr.rel target = $region65
              $region70: #{hubert_classification_head.1} parent=55 // loop_exit
                _
            $region56: #{hubert_classification_head.1} parent=47 // pred_fallthru
              _
          $region48: #{hubert_classification_head.1} parent=43 // pred_fallthru
            _
          %1124 = vnop
        $region44: #{hubert_classification_head.1} parent=31 // pred_fallthru
          _
      $region32: #{hubert_classification_head.1} parent=5 // pred_fallthru
        _
      %p1125 = scmp.le.s32.totalorder 2, %s13
      // Predicated region
      $region89: #{hubert_classification_head.1} parent=5 // pred_check
        %p1126 = pneg %p1125
      $region90: #{hubert_classification_head.1} parent=5 // pred_check_branch
        %1128 = sbr.rel (%p1126) target = $region92
      $region91: #{hubert_classification_head.1} parent=5 // pred_region
        %s1129 = ssub.s32 %s13, 2
        // Predicated region
        $region93: #{hubert_classification_head.1} parent=91 // pred_check
          %p1130 = pneg %p110
        $region94: #{hubert_classification_head.1} parent=91 // pred_check_branch
          %1132 = sbr.rel (%p1130) target = $region96
        $region95: #{hubert_classification_head.1} parent=91 // pred_region
          %s1133 = sand.u32 %s95, 1
          %s1134 = sand.u32 %s95, 1
          %s1135 = smul.addr %s1134, 16
          %s1136 = scalar_lea.vmem [#allocation6], %s1135
        $region96: #{hubert_classification_head.1} parent=91 // pred_fallthru
          _
      $region92: #{hubert_classification_head.1} parent=5 // pred_fallthru
        _
    $region6: #{hubert_classification_head.1} parent=1 // loop_footer
      %s17 = sadd.s32 1, %s13
    $region7: #{hubert_classification_head.1} parent=1 // loop_footer_branch
      %12 = sbr.rel target = $region3
    $region8: #{hubert_classification_head.1} parent=1 // loop_exit
      _
    %1137 = vsyncpa [#allocation3], 1
    %s1138 = scalar_lea.sflag [#allocation3], 1
    %1139 = vsyncpa %s1138, 1
    %1140 = vsyncpa [#allocation5], 1

</llo_original>
